<compile_context>
chip_gen: v7x
topology: tpu7x:2x2x1
jax: 0.10.0
libtpu: 0.0.40
codegen_flags: <defaults>
</compile_context>

<pallas_src>
import functools

import jax
import jax.numpy as jnp
from jax import lax
from jax.experimental import pallas as pl
from jax.experimental.pallas import tpu as pltpu


NEG_BIG = -1e30
# Safe on v5e / v6e / v7x (v7x has only 64 MiB physical VMEM per TC); working
# sets here are a few MiB even at tq=256 / tk=512.
_VMEM_LIMIT = 32 * 1024 * 1024


def _round_up(n, m):
    return ((n + m - 1) // m) * m


def _pick_tile(total, desired, *, keep_two_blocks=False):
    """Largest power-of-two multiple of 128 (<= desired) dividing `total`.

    If keep_two_blocks, also cap at total // 2 (when possible) so the
    corresponding "parallel" grid axis has >= 2 blocks (v7x megacore)."""
    cap = desired
    if keep_two_blocks and total >= 256:
        cap = min(cap, total // 2)
    best, t = 128, 128
    while t <= cap:
        if total % t == 0:
            best = t
        t *= 2
    return best


# ---------------------------------------------------------------------------
# Kernel 1: fused projection  proj = x @ W_fused + b_fused   (bf16 in/out)
#   W_fused columns: [ Wq/sqrt(C) | Ws | Wk | Wv ], each zero-padded to Cpad.
# ---------------------------------------------------------------------------
def _proj_kernel(x_ref, w_ref, b_ref, p_ref):
    acc = jnp.dot(x_ref[...], w_ref[...], preferred_element_type=jnp.float32)
    p_ref[...] = (acc + b_ref[...]).astype(p_ref.dtype)


def fused_projection(x_pad, w_fused, b_fused, *, tm_desired=512):
    npad, fpad = x_pad.shape
    four_c = w_fused.shape[1]
    tm = _pick_tile(npad, tm_desired, keep_two_blocks=True)
    grid = (npad // tm,)
    cost = pl.CostEstimate(
        flops=int(2 * npad * fpad * four_c),
        transcendentals=0,
        bytes_accessed=int(2 * (npad * fpad + fpad * four_c + npad * four_c)
                           + 4 * four_c),
    )
    return pl.pallas_call(
        _proj_kernel,
        out_shape=jax.ShapeDtypeStruct((npad, four_c), jnp.bfloat16),
        grid_spec=pltpu.PrefetchScalarGridSpec(
            num_scalar_prefetch=0,
            grid=grid,
            in_specs=[
                pl.BlockSpec((tm, fpad), lambda i: (i, 0)),
                pl.BlockSpec((fpad, four_c), lambda i: (0, 0)),   # resident
                pl.BlockSpec((1, four_c), lambda i: (0, 0)),      # bias (f32)
            ],
            out_specs=pl.BlockSpec((tm, four_c), lambda i: (i, 0)),
        ),
        compiler_params=pltpu.CompilerParams(
            dimension_semantics=("parallel",),
            vmem_limit_bytes=_VMEM_LIMIT,
        ),
        cost_estimate=cost,
    )(x_pad, w_fused, b_fused)


# ---------------------------------------------------------------------------
# Kernel 2: masked attention with online (flash) softmax over source blocks.
#   nz_ref : SMEM int32 table, nonzero-edge flag per (target block, src block)
#   qs_ref : target-row block of proj, cols [ q | skip ]  (bf16, resident/ki)
#   kv_ref : source-row block of proj, cols [ k | v ]     (bf16)
#   adj_ref: int8 adjacency tile, adj[i, j] = 1 iff edge j -> i
# ---------------------------------------------------------------------------
def _attn_kernel(nz_ref, qs_ref, kv_ref, adj_ref, out_ref, m_sc, l_sc, acc_sc,
                 *, cpad, out_act, c_real):
    qi = pl.program_id(0)
    ki = pl.program_id(1)
    nk = pl.num_programs(1)

    @pl.when(ki == 0)
    def _():
        m_sc[...] = jnp.full_like(m_sc, NEG_BIG)
        l_sc[...] = jnp.zeros_like(l_sc)
        acc_sc[...] = jnp.zeros_like(acc_sc)

    # Skip tiles with no edges: the mask/exp/matmul work would all be no-ops.
    @pl.when(nz_ref[qi * nk + ki] > 0)
    def _():
        q = qs_ref[:, :cpad]                  # bf16, already scaled by 1/sqrt(C)
        k = kv_ref[:, :cpad]                  # bf16
        v = kv_ref[:, cpad:]                  # bf16
        mask = adj_ref[...] != 0              # int8 adjacency -> bool

        # Q K^T with the transpose absorbed into the contraction (no vxpose).
        s = lax.dot_general(q, k, (((1,), (1,)), ((), ())),
                            preferred_element_type=jnp.float32)
        s_m = jnp.where(mask, s, NEG_BIG)

        m_prev = m_sc[...]
        m_new = jnp.maximum(m_prev, jnp.max(s_m, axis=-1, keepdims=True))
        rescale = jnp.exp(m_prev - m_new)
        # Single select zeroes non-edge entries exactly (rows with no in-edges
        # yet would otherwise see exp(0) == 1 at masked positions).
        p = jnp.where(mask, jnp.exp(s_m - m_new), 0.0)
        l_sc[...] = rescale * l_sc[...] + jnp.sum(p, axis=-1, keepdims=True)
        acc_sc[...] = rescale * acc_sc[...] + jnp.dot(
            p.astype(jnp.bfloat16), v, preferred_element_type=jnp.float32)
        m_sc[...] = m_new

    @pl.when(ki == nk - 1)
    def _():
        skip = qs_ref[:, cpad:].astype(jnp.float32)
        inv_l = pl.reciprocal(jnp.maximum(l_sc[...], 1e-16), approx=True)
        out = acc_sc[...] * inv_l + skip      # isolated nodes: acc == 0 -> skip
        if out_act == "relu":
            out = jnp.maximum(out, 0.0)
        elif out_act == "softmax":
            # Class softmax over real classes only (padded lanes masked out).
            cols = lax.broadcasted_iota(jnp.int32, out.shape, 1)
            logits = jnp.where(cols < c_real, out, NEG_BIG)
            mm = jnp.max(logits, axis=-1, keepdims=True)
            ee = jnp.exp(logits - mm)
            out = ee / jnp.sum(ee, axis=-1, keepdims=True)  # exact: rows sum 1
        out_ref[...] = out.astype(out_ref.dtype)


def masked_attention(proj, adj_pad, *, cpad, c_real, out_act, out_dtype,
                     tq_desired=256, tk_desired=512):
    npad = adj_pad.shape[0]
    tq = _pick_tile(npad, tq_desired, keep_two_blocks=True)
    tk = _pick_tile(npad, tk_desired)
    nq, nk = npad // tq, npad // tk
    grid = (nq, nk)

    # Per-(target block, source block) edge-presence table (scalar prefetch).
    nz = (adj_pad.reshape(nq, tq, nk, tk) != 0).any(axis=(1, 3))
    nz = nz.astype(jnp.int32).reshape(-1)

    out_bytes = jnp.dtype(out_dtype).itemsize
    cost = pl.CostEstimate(
        flops=int(4 * npad * npad * cpad),
        transcendentals=int(npad * npad + npad),
        bytes_accessed=int(npad * npad                    # adjacency (int8)
                           + npad * 2 * cpad * 2          # [q|skip] once (bf16)
                           + nq * npad * 2 * cpad * 2     # [k|v] per q-block
                           + npad * cpad * out_bytes),
    )
    kernel = functools.partial(_attn_kernel, cpad=cpad, out_act=out_act,
                               c_real=c_real)
    return pl.pallas_call(
        kernel,
        out_shape=jax.ShapeDtypeStruct((npad, cpad), out_dtype),
        grid_spec=pltpu.PrefetchScalarGridSpec(
            num_scalar_prefetch=1,
            grid=grid,
            in_specs=[
                # target rows, columns [0 : 2*Cpad] of proj  -> [q | skip]
                pl.BlockSpec((tq, 2 * cpad), lambda qi, ki, nz_tab: (qi, 0)),
                # source rows, columns [2*Cpad : 4*Cpad] of proj -> [k | v]
                pl.BlockSpec((tk, 2 * cpad), lambda qi, ki, nz_tab: (ki, 1)),
                # adjacency tile (int8)
                pl.BlockSpec((tq, tk), lambda qi, ki, nz_tab: (qi, ki)),
            ],
            out_specs=pl.BlockSpec((tq, cpad), lambda qi, ki, nz_tab: (qi, 0)),
            scratch_shapes=[
                pltpu.VMEM((tq, 1), jnp.float32),     # running row max m
                pltpu.VMEM((tq, 1), jnp.float32),     # running denom  l
                pltpu.VMEM((tq, cpad), jnp.float32),  # running numerator acc
            ],
        ),
        compiler_params=pltpu.CompilerParams(
            dimension_semantics=("parallel", "arbitrary"),
            vmem_limit_bytes=_VMEM_LIMIT,
        ),
        cost_estimate=cost,
    )(nz, proj, proj, adj_pad)


# ---------------------------------------------------------------------------
# Parameter handling
# ---------------------------------------------------------------------------
def init_transformer_conv_params(key, fan_in, fan_out):
    ks = jax.random.split(key, 8)
    scale = 1.0 / jnp.sqrt(jnp.float32(fan_in))

    def lin(kw, kb):
        w = jax.random.normal(kw, (fan_in, fan_out), jnp.float32) * scale
        b = jax.random.normal(kb, (1, fan_out), jnp.float32) * 0.01
        return w, b

    wq, bq = lin(ks[0], ks[1])
    wk, bk = lin(ks[2], ks[3])
    wv, bv = lin(ks[4], ks[5])
    ws, bs = lin(ks[6], ks[7])
    return dict(wq=wq, bq=bq, wk=wk, bk=bk, wv=wv, bv=bv, ws=ws, bs=bs)


def pack_transformer_conv_params(params, fpad, cpad):
    """Fuse Q/skip/K/V projections into one lane-dense [fpad, 4*cpad] weight.

    Column order [q | skip | k | v]; 1/sqrt(C) folded into the q section.
    Weight cast to bf16 (single-pass MXU); bias kept f32 (added post-matmul).
    """
    fan_in, c = params["wq"].shape
    inv_sqrt_c = 1.0 / jnp.sqrt(jnp.float32(c))

    def pad_w(w):
        return jnp.zeros((fpad, cpad), jnp.float32).at[:fan_in, :c].set(w)

    def pad_b(b):
        return jnp.zeros((1, cpad), jnp.float32).at[:, :c].set(b)

    w_fused = jnp.concatenate([
        pad_w(params["wq"] * inv_sqrt_c),
        pad_w(params["ws"]),
        pad_w(params["wk"]),
        pad_w(params["wv"]),
    ], axis=1).astype(jnp.bfloat16)
    b_fused = jnp.concatenate([
        pad_b(params["bq"] * inv_sqrt_c),
        pad_b(params["bs"]),
        pad_b(params["bk"]),
        pad_b(params["bv"]),
    ], axis=1)
    return w_fused, b_fused


def transformer_conv(x_pad, adj_pad, w_fused, b_fused, *, c_real, out_act,
                     out_dtype):
    cpad = w_fused.shape[1] // 4
    proj = fused_projection(x_pad, w_fused, b_fused)
    return masked_attention(proj, adj_pad, cpad=cpad, c_real=c_real,
                            out_act=out_act, out_dtype=out_dtype)


def unimp_forward(x, adj, params1, params2, *, nhid, num_classes):
    n, fin = x.shape
    npad = _round_up(n, 128)
    fpad1 = _round_up(fin, 128)
    cpad1 = _round_up(nhid, 128)
    cpad2 = _round_up(num_classes, 128)

    x_pad = jnp.zeros((npad, fpad1), jnp.bfloat16).at[:n, :fin].set(
        x.astype(jnp.bfloat16))
    adj_pad = jnp.zeros((npad, npad), jnp.int8).at[:n, :n].set(
        (adj > 0).astype(jnp.int8))

    w1, b1 = pack_transformer_conv_params(params1, fpad1, cpad1)
    w2, b2 = pack_transformer_conv_params(params2, cpad1, cpad2)

    # conv1 -> ReLU (fused in attention-kernel epilogue), bf16 hidden state
    h = transformer_conv(x_pad, adj_pad, w1, b1, c_real=nhid, out_act="relu",
                         out_dtype=jnp.bfloat16)
    # F.dropout: eval mode -> identity (TODO above)
    # conv2 -> softmax over class dim (fused in attention-kernel epilogue)
    out_pad = transformer_conv(h, adj_pad, w2, b2, c_real=num_classes,
                               out_act="softmax", out_dtype=jnp.float32)
    return out_pad[:n, :num_classes]


if __name__ == "__main__":
    key = jax.random.PRNGKey(0)
    k_x, k_src, k_dst, k_p1, k_p2 = jax.random.split(key, 5)

    num_nodes = 16
    num_node_features = 8
    nhid = 32
    num_classes = 8
    num_edges = 48

    x = jax.random.normal(k_x, (num_nodes, num_node_features), jnp.float32)

    src = jax.random.randint(k_src, (num_edges,), 0, num_nodes)
    dst = jax.random.randint(k_dst, (num_edges,), 0, num_nodes)
    edge_index = jnp.stack([src, dst], axis=0)        # [2, E], PyG convention

    # Densify edge_index: adj[i, j] = 1 iff edge j -> i exists.
    adj = jnp.zeros((num_nodes, num_nodes), jnp.float32)
    adj = adj.at[edge_index[1], edge_index[0]].set(1.0)

    params1 = init_transformer_conv_params(k_p1, num_node_features, nhid)
    params2 = init_transformer_conv_params(k_p2, nhid, num_classes)

    out = unimp_forward(x, adj, params1, params2,
                        nhid=nhid, num_classes=num_classes)
    out = jax.block_until_ready(out)

    assert out.shape == (num_nodes, num_classes)
    # rows of the final softmax must sum to 1
    assert bool(jnp.allclose(jnp.sum(out, axis=1), 1.0, atol=1e-4))
    print("KERNEL_OK")
</pallas_src>

<mosaic_0001>
module attributes {stable_mosaic.version = 11 : i64} {
  func.func @_proj_kernel(%arg0: i32, %arg1: memref<128x128xbf16, #tpu.memory_space<vmem>>, %arg2: memref<128x512xbf16, #tpu.memory_space<vmem>>, %arg3: memref<1x512xf32, #tpu.memory_space<vmem>>, %arg4: memref<128x512xbf16, #tpu.memory_space<vmem>>) attributes {dimension_semantics = [#tpu.dimension_semantics<parallel>], iteration_bounds = array<i64: 1>, scalar_prefetch = 0 : i64, scratch_operands = 0 : i64, tpu.core_type = #tpu.core_type<tc>, window_params = [{transform_indices = @transform_0, window_bounds = array<i64: 128, 128>}, {pipeline_mode = #tpu.pipeline_mode<synchronous>, transform_indices = @transform_1, window_bounds = array<i64: 128, 512>}, {pipeline_mode = #tpu.pipeline_mode<synchronous>, transform_indices = @transform_2, window_bounds = array<i64: 1, 512>}, {transform_indices = @transform_3, window_bounds = array<i64: 128, 512>}]} {
    %c0 = arith.constant 0 : index
    %c0_0 = arith.constant 0 : index
    %0 = vector.load %arg1[%c0, %c0_0] : memref<128x128xbf16, #tpu.memory_space<vmem>>, vector<128x128xbf16>
    %c0_1 = arith.constant 0 : index
    %c0_2 = arith.constant 0 : index
    %1 = vector.load %arg2[%c0_1, %c0_2] : memref<128x512xbf16, #tpu.memory_space<vmem>>, vector<128x512xbf16>
    %cst = arith.constant dense<0.000000e+00> : vector<128x512xf32>
    %2 = tpu.matmul %0, %1, %cst {dimension_numbers = #tpu.dot_dimension_numbers<[1], [0], [0], [1], [0, 0, 1, 1], [], []>} : vector<128x128xbf16>, vector<128x512xbf16>, vector<128x512xf32> -> vector<128x512xf32>
    %c0_3 = arith.constant 0 : index
    %c0_4 = arith.constant 0 : index
    %3 = vector.load %arg3[%c0_3, %c0_4] : memref<1x512xf32, #tpu.memory_space<vmem>>, vector<1x512xf32>
    %4 = vector.broadcast %3 : vector<1x512xf32> to vector<128x512xf32>
    %5 = arith.addf %2, %4 : vector<128x512xf32>
    %6 = arith.truncf %5 : vector<128x512xf32> to vector<128x512xbf16>
    %c0_5 = arith.constant 0 : index
    %c0_6 = arith.constant 0 : index
    %7 = vector.load %arg4[%c0_5, %c0_6] : memref<128x512xbf16, #tpu.memory_space<vmem>>, vector<128x512xbf16>
    tpu.vector_store %arg4[%c0_5, %c0_6], %6 {strides = array<i32>} : memref<128x512xbf16, #tpu.memory_space<vmem>>, vector<128x512xbf16>,
    return
  }
  func.func @transform_0(%arg0: i32) -> (i32, i32) {
    %c0_i32 = arith.constant 0 : i32
    %c0_i32_0 = arith.constant 0 : i32
    return %arg0, %c0_i32 : i32, i32
  }
  func.func @transform_1(%arg0: i32) -> (i32, i32) {
    %c0_i32 = arith.constant 0 : i32
    %c0_i32_0 = arith.constant 0 : i32
    %c0_i32_1 = arith.constant 0 : i32
    return %c0_i32, %c0_i32_0 : i32, i32
  }
  func.func @transform_2(%arg0: i32) -> (i32, i32) {
    %c0_i32 = arith.constant 0 : i32
    %c0_i32_0 = arith.constant 0 : i32
    %c0_i32_1 = arith.constant 0 : i32
    return %c0_i32, %c0_i32_0 : i32, i32
  }
  func.func @transform_3(%arg0: i32) -> (i32, i32) {
    %c0_i32 = arith.constant 0 : i32
    %c0_i32_0 = arith.constant 0 : i32
    return %arg0, %c0_i32 : i32, i32
  }
}

</mosaic_0001>

<llo_original>
// kernel: tpu_custom_call.1
$region0: #{tpu_custom_call.1}
  #allocation0 [shape = 'u32[]', space=smem, size = 0x4, offset = 0x4, fixed_abs, tag = 'smem constant byte address 0x4 - core index']
  #allocation1 [shape = 'u32[144,128]{1,0:T(1,128)}', space=vmem, size = 0x12000, scoped, tag = 'internal scratch']
  %s0 = inlined_call_operand.hbm [shape: bf16[128,128], index: 0, kind: input, shape index: {}]
  %s1 = inlined_call_operand.hbm [shape: bf16[128,512], index: 1, kind: input, shape index: {}]
  %s2 = inlined_call_operand.vmem [shape: f32[1,512], index: 2, kind: input, shape index: {}]
  %s3 = inlined_call_operand.hbm [shape: bf16[128,512], index: 3, kind: output, shape index: {}]
  %s4 = sld [smem:[#allocation0]]
  $region30: #{tpu_custom_call.1} parent=0
    _
  %s6 = ssub.s32 1, %s4
  %s7 = scalar_select 0, %s6, %s4
  $region1: #{tpu_custom_call.1} parent=0
    #allocation2 [shape = 'u8[32768]{0}', space=vmem, size = 0x8000, scoped, tag = 'input window, operand 0, single buffered']
    #allocation3 [shape = 's32[1]{0}', space=sflag, size = 0x4, scoped, tag = 'scoped memory for tpu_custom_call.1']
    #allocation4 [shape = 's32[1]{0}', space=sflag, size = 0x4, scoped, tag = 'scoped memory for tpu_custom_call.1']
    #allocation5 [shape = 'u8[131072]{0}', space=vmem, size = 0x20000, scoped, tag = 'input window, operand 1, single buffered']
    #allocation6 [shape = 's32[1]{0}', space=sflag, size = 0x4, scoped, tag = 'scoped memory for tpu_custom_call.1']
    #allocation7 [shape = 'u8[131072]{0}', space=vmem, size = 0x20000, scoped, tag = 'output window, operand 0, single buffered']
    %8 = vsyncpa [#allocation3], 0
    %9 = vsyncpa [#allocation6], 0
    %10 = vsyncpa [#allocation4], 0
    // Predicated region
    $region2: #{tpu_custom_call.1} parent=1 // pred_check
      _
    $region3: #{tpu_custom_call.1} parent=1 // pred_check_branch
      %12 = sbr.rel (0) target = $region5
    $region4: #{tpu_custom_call.1} parent=1 // pred_region
      %s14 = ssub.s32 1024, 1024
      %15 = vsyncadd [#allocation3], %s14
      %s16 = sshll.u32 [#allocation2], 4
      %s17 = int_to_ptr.vmem [resolvable:$true] %s16
      %22 = dma.hbm_to_vmem [thread:$0]  %s0, 1024, %s17, [#allocation3], 64, 64, 4
    $region5: #{tpu_custom_call.1} parent=1 // pred_fallthru
      _
    // Predicated region
    $region6: #{tpu_custom_call.1} parent=1 // pred_check
      _
    $region7: #{tpu_custom_call.1} parent=1 // pred_check_branch
      %24 = sbr.rel (0) target = $region9
    $region8: #{tpu_custom_call.1} parent=1 // pred_region
      %s26 = ssub.s32 4096, 4096
      %27 = vsyncadd [#allocation6], %s26
      %s28 = sshll.u32 [#allocation5], 4
      %s29 = int_to_ptr.vmem [resolvable:$true] %s28
      %34 = dma.hbm_to_vmem [thread:$0]  %s1, 4096, %s29, [#allocation6], 256, 256, 16
    $region9: #{tpu_custom_call.1} parent=1 // pred_fallthru
      _
    // Predicated region
    $region10: #{tpu_custom_call.1} parent=1 // pred_check
      _
    $region11: #{tpu_custom_call.1} parent=1 // pred_check_branch
      %36 = sbr.rel (0) target = $region13
    $region12: #{tpu_custom_call.1} parent=1 // pred_region
      _
    $region13: #{tpu_custom_call.1} parent=1 // pred_fallthru
      _
    // Predicated region
    $region14: #{tpu_custom_call.1} parent=1 // pred_check
      _
    $region15: #{tpu_custom_call.1} parent=1 // pred_check_branch
      %38 = sbr.rel (0) target = $region17
    $region16: #{tpu_custom_call.1} parent=1 // pred_region
      %39 = dma.done [#allocation3], 1024
    $region17: #{tpu_custom_call.1} parent=1 // pred_fallthru
      _
    // Predicated region
    $region18: #{tpu_custom_call.1} parent=1 // pred_check
      _
    $region19: #{tpu_custom_call.1} parent=1 // pred_check_branch
      %41 = sbr.rel (0) target = $region21
    $region20: #{tpu_custom_call.1} parent=1 // pred_region
      %42 = dma.done [#allocation6], 4096
    $region21: #{tpu_custom_call.1} parent=1 // pred_fallthru
      _
    %v44 = vld [vmem:[#allocation2] sm:$0xf]
    %v45 = vld [vmem:[#allocation2 + $0x4] sm:$0xf]
    %v46 = vld [vmem:[#allocation2 + $0x8] sm:$0xf]
    %v47 = vld [vmem:[#allocation2 + $0xc] sm:$0xf]
    %v48 = vld [vmem:[#allocation2 + $0x10] sm:$0xf]
    %v49 = vld [vmem:[#allocation2 + $0x14] sm:$0xf]
    %v50 = vld [vmem:[#allocation2 + $0x18] sm:$0xf]
    %v51 = vld [vmem:[#allocation2 + $0x1c] sm:$0xf]
    %v52 = vld [vmem:[#allocation2 + $0x20] sm:$0xf]
    %v53 = vld [vmem:[#allocation2 + $0x24] sm:$0xf]
    %v54 = vld [vmem:[#allocation2 + $0x28] sm:$0xf]
    %v55 = vld [vmem:[#allocation2 + $0x2c] sm:$0xf]
    %v56 = vld [vmem:[#allocation2 + $0x30] sm:$0xf]
    %v57 = vld [vmem:[#allocation2 + $0x34] sm:$0xf]
    %v58 = vld [vmem:[#allocation2 + $0x38] sm:$0xf]
    %v59 = vld [vmem:[#allocation2 + $0x3c] sm:$0xf]
    %v60 = vld [vmem:[#allocation5] sm:$0xff]
    %v61 = vld [vmem:[#allocation5 + $0x8] sm:$0xff]
    %v62 = vld [vmem:[#allocation5 + $0x10] sm:$0xff]
    %v63 = vld [vmem:[#allocation5 + $0x18] sm:$0xff]
    %v64 = vld [vmem:[#allocation5 + $0x20] sm:$0xff]
    %v65 = vld [vmem:[#allocation5 + $0x28] sm:$0xff]
    %v66 = vld [vmem:[#allocation5 + $0x30] sm:$0xff]
    %v67 = vld [vmem:[#allocation5 + $0x38] sm:$0xff]
    %v68 = vld [vmem:[#allocation5 + $0x40] sm:$0xff]
    %v69 = vld [vmem:[#allocation5 + $0x48] sm:$0xff]
    %v70 = vld [vmem:[#allocation5 + $0x50] sm:$0xff]
    %v71 = vld [vmem:[#allocation5 + $0x58] sm:$0xff]
    %v72 = vld [vmem:[#allocation5 + $0x60] sm:$0xff]
    %v73 = vld [vmem:[#allocation5 + $0x68] sm:$0xff]
    %v74 = vld [vmem:[#allocation5 + $0x70] sm:$0xff]
    %v75 = vld [vmem:[#allocation5 + $0x78] sm:$0xff]
    %v76 = vld [vmem:[#allocation5 + $0x80] sm:$0xff]
    %v77 = vld [vmem:[#allocation5 + $0x88] sm:$0xff]
    %v78 = vld [vmem:[#allocation5 + $0x90] sm:$0xff]
    %v79 = vld [vmem:[#allocation5 + $0x98] sm:$0xff]
    %v80 = vld [vmem:[#allocation5 + $0xa0] sm:$0xff]
    %v81 = vld [vmem:[#allocation5 + $0xa8] sm:$0xff]
    %v82 = vld [vmem:[#allocation5 + $0xb0] sm:$0xff]
    %v83 = vld [vmem:[#allocation5 + $0xb8] sm:$0xff]
    %v84 = vld [vmem:[#allocation5 + $0xc0] sm:$0xff]
    %v85 = vld [vmem:[#allocation5 + $0xc8] sm:$0xff]
    %v86 = vld [vmem:[#allocation5 + $0xd0] sm:$0xff]
    %v87 = vld [vmem:[#allocation5 + $0xd8] sm:$0xff]
    %v88 = vld [vmem:[#allocation5 + $0xe0] sm:$0xff]
    %v89 = vld [vmem:[#allocation5 + $0xe8] sm:$0xff]
    %v90 = vld [vmem:[#allocation5 + $0xf0] sm:$0xff]
    %v91 = vld [vmem:[#allocation5 + $0xf8] sm:$0xff]
    %v92 = vld [vmem:[%s2] sm:$0xf]
    %v94 = vlaneseq
    %v95 = vshrl.u32 %v94, 7
    %v96 = vsub.s32 0, %v95
    %v97 = vrot.slane %v92, %v96
    %v98 = vlaneseq
    %v99 = vshrl.u32 %v98, 7
    %v100 = vsub.s32 1, %v99
    %v101 = vrot.slane %v92, %v100
    %v102 = vlaneseq
    %v103 = vshrl.u32 %v102, 7
    %v104 = vsub.s32 2, %v103
    %v105 = vrot.slane %v92, %v104
    %v106 = vlaneseq
    %v107 = vshrl.u32 %v106, 7
    %v108 = vsub.s32 3, %v107
    %v109 = vrot.slane %v92, %v108
    %v130 = vunpack.c.l.b16 %v44
    %v131 = vunpack.c.l.b16 %v45
    %v132 = vunpack.c.l.b16 %v46
    %v133 = vunpack.c.l.b16 %v47
    %v134 = vunpack.c.l.b16 %v48
    %v135 = vunpack.c.l.b16 %v49
    %v136 = vunpack.c.l.b16 %v50
    %v137 = vunpack.c.l.b16 %v51
    %v138 = vunpack.c.l.b16 %v52
    %v139 = vunpack.c.l.b16 %v53
    %v140 = vunpack.c.l.b16 %v54
    %v141 = vunpack.c.l.b16 %v55
    %v142 = vunpack.c.l.b16 %v56
    %v143 = vunpack.c.l.b16 %v57
    %v144 = vunpack.c.l.b16 %v58
    %v145 = vunpack.c.l.b16 %v59
    %v146 = vpack.c.b16 %v131, %v130
    %v147 = vpack.c.b16 %v133, %v132
    %v148 = vpack.c.b16 %v135, %v134
    %v149 = vpack.c.b16 %v137, %v136
    %v150 = vpack.c.b16 %v139, %v138
    %v151 = vpack.c.b16 %v141, %v140
    %v152 = vpack.c.b16 %v143, %v142
    %v153 = vpack.c.b16 %v145, %v144
    %v194 = vunpack.c.l.b16 %v60
    %v195 = vunpack.c.h.b16 %v60
    %v196 = vunpack.c.l.b16 %v61
    %v197 = vunpack.c.h.b16 %v61
    %v198 = vunpack.c.l.b16 %v62
    %v199 = vunpack.c.h.b16 %v62
    %v200 = vunpack.c.l.b16 %v63
    %v201 = vunpack.c.h.b16 %v63
    %v202 = vunpack.c.l.b16 %v64
    %v203 = vunpack.c.h.b16 %v64
    %v204 = vunpack.c.l.b16 %v65
    %v205 = vunpack.c.h.b16 %v65
    %v206 = vunpack.c.l.b16 %v66
    %v207 = vunpack.c.h.b16 %v66
    %v208 = vunpack.c.l.b16 %v67
    %v209 = vunpack.c.h.b16 %v67
    %v210 = vunpack.c.l.b16 %v68
    %v211 = vunpack.c.h.b16 %v68
    %v212 = vunpack.c.l.b16 %v69
    %v213 = vunpack.c.h.b16 %v69
    %v214 = vunpack.c.l.b16 %v70
    %v215 = vunpack.c.h.b16 %v70
    %v216 = vunpack.c.l.b16 %v71
    %v217 = vunpack.c.h.b16 %v71
    %v218 = vunpack.c.l.b16 %v72
    %v219 = vunpack.c.h.b16 %v72
    %v220 = vunpack.c.l.b16 %v73
    %v221 = vunpack.c.h.b16 %v73
    %v222 = vunpack.c.l.b16 %v74
    %v223 = vunpack.c.h.b16 %v74
    %v224 = vunpack.c.l.b16 %v75
    %v225 = vunpack.c.h.b16 %v75
    %v226 = vunpack.c.l.b16 %v76
    %v227 = vunpack.c.h.b16 %v76
    %v228 = vunpack.c.l.b16 %v77
    %v229 = vunpack.c.h.b16 %v77
    %v230 = vunpack.c.l.b16 %v78
    %v231 = vunpack.c.h.b16 %v78
    %v232 = vunpack.c.l.b16 %v79
    %v233 = vunpack.c.h.b16 %v79
    %v234 = vunpack.c.l.b16 %v80
    %v235 = vunpack.c.h.b16 %v80
    %v236 = vunpack.c.l.b16 %v81
    %v237 = vunpack.c.h.b16 %v81
    %v238 = vunpack.c.l.b16 %v82
    %v239 = vunpack.c.h.b16 %v82
    %v240 = vunpack.c.l.b16 %v83
    %v241 = vunpack.c.h.b16 %v83
    %v242 = vunpack.c.l.b16 %v84
    %v243 = vunpack.c.h.b16 %v84
    %v244 = vunpack.c.l.b16 %v85
    %v245 = vunpack.c.h.b16 %v85
    %v246 = vunpack.c.l.b16 %v86
    %v247 = vunpack.c.h.b16 %v86
    %v248 = vunpack.c.l.b16 %v87
    %v249 = vunpack.c.h.b16 %v87
    %v250 = vunpack.c.l.b16 %v88
    %v251 = vunpack.c.h.b16 %v88
    %v252 = vunpack.c.l.b16 %v89
    %v253 = vunpack.c.h.b16 %v89
    %v254 = vunpack.c.l.b16 %v90
    %v255 = vunpack.c.h.b16 %v90
    %v256 = vunpack.c.l.b16 %v91
    %v257 = vunpack.c.h.b16 %v91
    %v258 = vpack.c.b16 %v198, %v194
    %v259 = vpack.c.b16 %v199, %v195
    %v260 = vpack.c.b16 %v200, %v196
    %v261 = vpack.c.b16 %v201, %v197
    %v262 = vpack.c.b16 %v206, %v202
    %v263 = vpack.c.b16 %v207, %v203
    %v264 = vpack.c.b16 %v208, %v204
    %v265 = vpack.c.b16 %v209, %v205
    %v266 = vpack.c.b16 %v214, %v210
    %v267 = vpack.c.b16 %v215, %v211
    %v268 = vpack.c.b16 %v216, %v212
    %v269 = vpack.c.b16 %v217, %v213
    %v270 = vpack.c.b16 %v222, %v218
    %v271 = vpack.c.b16 %v223, %v219
    %v272 = vpack.c.b16 %v224, %v220
    %v273 = vpack.c.b16 %v225, %v221
    %v274 = vpack.c.b16 %v230, %v226
    %v275 = vpack.c.b16 %v231, %v227
    %v276 = vpack.c.b16 %v232, %v228
    %v277 = vpack.c.b16 %v233, %v229
    %v278 = vpack.c.b16 %v238, %v234
    %v279 = vpack.c.b16 %v239, %v235
    %v280 = vpack.c.b16 %v240, %v236
    %v281 = vpack.c.b16 %v241, %v237
    %v282 = vpack.c.b16 %v246, %v242
    %v283 = vpack.c.b16 %v247, %v243
    %v284 = vpack.c.b16 %v248, %v244
    %v285 = vpack.c.b16 %v249, %v245
    %v286 = vpack.c.b16 %v254, %v250
    %v287 = vpack.c.b16 %v255, %v251
    %v288 = vpack.c.b16 %v256, %v252
    %v289 = vpack.c.b16 %v257, %v253
    %322 = vmatprep.subr.bf16.mxu0 %v259
    %323 = vmatpush1.bf16.msra.mxu0 %v258
    %324 = vmatprep.subr.bf16.mxu0 %v263
    %325 = vmatpush1.bf16.msra.mxu0 %v262
    %326 = vmatprep.subr.bf16.mxu0 %v267
    %327 = vmatpush1.bf16.msra.mxu0 %v266
    %328 = vmatprep.subr.bf16.mxu0 %v271
    %329 = vmatpush1.bf16.msra.mxu0 %v270
    %330 = vmatprep.subr.bf16.mxu0 %v275
    %331 = vmatpush1.bf16.msra.mxu0 %v274
    %332 = vmatprep.subr.bf16.mxu0 %v279
    %333 = vmatpush1.bf16.msra.mxu0 %v278
    %334 = vmatprep.subr.bf16.mxu0 %v283
    %335 = vmatpush1.bf16.msra.mxu0 %v282
    %336 = vmatprep.subr.bf16.mxu0 %v287
    %337 = vmatpush1.bf16.msra.mxu0 %v286
    %338 = vmatprep.subr.bf16.mxu0 0
    %339 = vmatpush1.bf16.msra.mxu0 0
    %340 = vmatprep.subr.bf16.mxu0 0
    %341 = vmatpush1.bf16.msra.mxu0 0
    %342 = vmatprep.subr.bf16.mxu0 0
    %343 = vmatpush1.bf16.msra.mxu0 0
    %344 = vmatprep.subr.bf16.mxu0 0
    %345 = vmatpush1.bf16.msra.mxu0 0
    %346 = vmatprep.subr.bf16.mxu0 0
    %347 = vmatpush1.bf16.msra.mxu0 0
    %348 = vmatprep.subr.bf16.mxu0 0
    %349 = vmatpush1.bf16.msra.mxu0 0
    %350 = vmatprep.subr.bf16.mxu0 0
    %351 = vmatpush1.bf16.msra.mxu0 0
    %352 = vmatprep.subr.bf16.mxu0 0
    %353 = vmatpush1.bf16.msra.mxu0 0
    %354 = vmatprep.mubr.bf16.mxu0 0
    %355 = vmatmul.mubr.bf16.gmra.mrb[0].mxu0 %v146
    %v356 = vpop.f32.mrb[0].mxu0
    %v357 = vadd.f32 %v97, %v356
    %v358 = vpop.f32.mrb[0].mxu0
    %v359 = vadd.f32 %v101, %v358
    %v360 = vpop.f32.mrb[0].mxu0
    %v361 = vadd.f32 %v97, %v360
    %v362 = vpop.f32.mrb[0].mxu0
    %v363 = vadd.f32 %v101, %v362
    %364 = vmatprep.mubr.bf16.mxu0 0
    %365 = vmatmul.mubr.bf16.gmra.mrb[0].mxu0 %v147
    %v366 = vpop.f32.mrb[0].mxu0
    %v367 = vadd.f32 %v97, %v366
    %v368 = vpop.f32.mrb[0].mxu0
    %v369 = vadd.f32 %v101, %v368
    %v370 = vpop.f32.mrb[0].mxu0
    %v371 = vadd.f32 %v97, %v370
    %v372 = vpop.f32.mrb[0].mxu0
    %v373 = vadd.f32 %v101, %v372
    %374 = vmatprep.mubr.bf16.mxu0 0
    %375 = vmatmul.mubr.bf16.gmra.mrb[0].mxu0 %v148
    %v376 = vpop.f32.mrb[0].mxu0
    %v377 = vadd.f32 %v97, %v376
    %v378 = vpop.f32.mrb[0].mxu0
    %v379 = vadd.f32 %v101, %v378
    %v380 = vpop.f32.mrb[0].mxu0
    %v381 = vadd.f32 %v97, %v380
    %v382 = vpop.f32.mrb[0].mxu0
    %v383 = vadd.f32 %v101, %v382
    %384 = vmatprep.mubr.bf16.mxu0 0
    %385 = vmatmul.mubr.bf16.gmra.mrb[0].mxu0 %v149
    %v386 = vpop.f32.mrb[0].mxu0
    %v387 = vadd.f32 %v97, %v386
    %v388 = vpop.f32.mrb[0].mxu0
    %v389 = vadd.f32 %v101, %v388
    %v390 = vpop.f32.mrb[0].mxu0
    %v391 = vadd.f32 %v97, %v390
    %v392 = vpop.f32.mrb[0].mxu0
    %v393 = vadd.f32 %v101, %v392
    %394 = vmatprep.mubr.bf16.mxu0 0
    %395 = vmatmul.mubr.bf16.gmra.mrb[0].mxu0 %v150
    %v396 = vpop.f32.mrb[0].mxu0
    %v397 = vadd.f32 %v97, %v396
    %v398 = vpop.f32.mrb[0].mxu0
    %v399 = vadd.f32 %v101, %v398
    %v400 = vpop.f32.mrb[0].mxu0
    %v401 = vadd.f32 %v97, %v400
    %v402 = vpop.f32.mrb[0].mxu0
    %v403 = vadd.f32 %v101, %v402
    %404 = vmatprep.mubr.bf16.mxu0 0
    %405 = vmatmul.mubr.bf16.gmra.mrb[0].mxu0 %v151
    %v406 = vpop.f32.mrb[0].mxu0
    %v407 = vadd.f32 %v97, %v406
    %v408 = vpop.f32.mrb[0].mxu0
    %v409 = vadd.f32 %v101, %v408
    %v410 = vpop.f32.mrb[0].mxu0
    %v411 = vadd.f32 %v97, %v410
    %v412 = vpop.f32.mrb[0].mxu0
    %v413 = vadd.f32 %v101, %v412
    %414 = vmatprep.mubr.bf16.mxu0 0
    %415 = vmatmul.mubr.bf16.gmra.mrb[0].mxu0 %v152
    %v416 = vpop.f32.mrb[0].mxu0
    %v417 = vadd.f32 %v97, %v416
    %v418 = vpop.f32.mrb[0].mxu0
    %v419 = vadd.f32 %v101, %v418
    %v420 = vpop.f32.mrb[0].mxu0
    %v421 = vadd.f32 %v97, %v420
    %v422 = vpop.f32.mrb[0].mxu0
    %v423 = vadd.f32 %v101, %v422
    %424 = vmatprep.mubr.bf16.mxu0 0
    %425 = vmatmul.mubr.bf16.gmra.mrb[0].mxu0 %v153
    %v426 = vpop.f32.mrb[0].mxu0
    %v427 = vadd.f32 %v97, %v426
    %v428 = vpop.f32.mrb[0].mxu0
    %v429 = vadd.f32 %v101, %v428
    %v430 = vpop.f32.mrb[0].mxu0
    %v431 = vadd.f32 %v97, %v430
    %v432 = vpop.f32.mrb[0].mxu0
    %v433 = vadd.f32 %v101, %v432
    %434 = vdwg.mxu0
    %435 = vmatprep.subr.bf16.mxu0 %v261
    %436 = vmatpush1.bf16.msra.mxu0 %v260
    %437 = vmatprep.subr.bf16.mxu0 %v265
    %438 = vmatpush1.bf16.msra.mxu0 %v264
    %439 = vmatprep.subr.bf16.mxu0 %v269
    %440 = vmatpush1.bf16.msra.mxu0 %v268
    %441 = vmatprep.subr.bf16.mxu0 %v273
    %442 = vmatpush1.bf16.msra.mxu0 %v272
    %443 = vmatprep.subr.bf16.mxu0 %v277
    %444 = vmatpush1.bf16.msra.mxu0 %v276
    %445 = vmatprep.subr.bf16.mxu0 %v281
    %446 = vmatpush1.bf16.msra.mxu0 %v280
    %447 = vmatprep.subr.bf16.mxu0 %v285
    %448 = vmatpush1.bf16.msra.mxu0 %v284
    %449 = vmatprep.subr.bf16.mxu0 %v289
    %450 = vmatpush1.bf16.msra.mxu0 %v288
    %451 = vmatprep.subr.bf16.mxu0 0
    %452 = vmatpush1.bf16.msra.mxu0 0
    %453 = vmatprep.subr.bf16.mxu0 0
    %454 = vmatpush1.bf16.msra.mxu0 0
    %455 = vmatprep.subr.bf16.mxu0 0
    %456 = vmatpush1.bf16.msra.mxu0 0
    %457 = vmatprep.subr.bf16.mxu0 0
    %458 = vmatpush1.bf16.msra.mxu0 0
    %459 = vmatprep.subr.bf16.mxu0 0
    %460 = vmatpush1.bf16.msra.mxu0 0
    %461 = vmatprep.subr.bf16.mxu0 0
    %462 = vmatpush1.bf16.msra.mxu0 0
    %463 = vmatprep.subr.bf16.mxu0 0
    %464 = vmatpush1.bf16.msra.mxu0 0
    %465 = vmatprep.subr.bf16.mxu0 0
    %466 = vmatpush1.bf16.msra.mxu0 0
    %467 = vmatprep.mubr.bf16.mxu0 0
    %468 = vmatmul.mubr.bf16.gmra.mrb[0].mxu0 %v146
    %v469 = vpop.f32.mrb[0].mxu0
    %v470 = vadd.f32 %v105, %v469
    %v471 = vpop.f32.mrb[0].mxu0
    %v472 = vadd.f32 %v109, %v471
    %v473 = vpop.f32.mrb[0].mxu0
    %v474 = vadd.f32 %v105, %v473
    %v475 = vpop.f32.mrb[0].mxu0
    %v476 = vadd.f32 %v109, %v475
    %477 = vmatprep.mubr.bf16.mxu0 0
    %478 = vmatmul.mubr.bf16.gmra.mrb[0].mxu0 %v147
    %v479 = vpop.f32.mrb[0].mxu0
    %v480 = vadd.f32 %v105, %v479
    %v481 = vpop.f32.mrb[0].mxu0
    %v482 = vadd.f32 %v109, %v481
    %v483 = vpop.f32.mrb[0].mxu0
    %v484 = vadd.f32 %v105, %v483
    %v485 = vpop.f32.mrb[0].mxu0
    %v486 = vadd.f32 %v109, %v485
    %487 = vmatprep.mubr.bf16.mxu0 0
    %488 = vmatmul.mubr.bf16.gmra.mrb[0].mxu0 %v148
    %v489 = vpop.f32.mrb[0].mxu0
    %v490 = vadd.f32 %v105, %v489
    %v491 = vpop.f32.mrb[0].mxu0
    %v492 = vadd.f32 %v109, %v491
    %v493 = vpop.f32.mrb[0].mxu0
    %v494 = vadd.f32 %v105, %v493
    %v495 = vpop.f32.mrb[0].mxu0
    %v496 = vadd.f32 %v109, %v495
    %497 = vmatprep.mubr.bf16.mxu0 0
    %498 = vmatmul.mubr.bf16.gmra.mrb[0].mxu0 %v149
    %v499 = vpop.f32.mrb[0].mxu0
    %v500 = vadd.f32 %v105, %v499
    %v501 = vpop.f32.mrb[0].mxu0
    %v502 = vadd.f32 %v109, %v501
    %v503 = vpop.f32.mrb[0].mxu0
    %v504 = vadd.f32 %v105, %v503
    %v505 = vpop.f32.mrb[0].mxu0
    %v506 = vadd.f32 %v109, %v505
    %507 = vmatprep.mubr.bf16.mxu0 0
    %508 = vmatmul.mubr.bf16.gmra.mrb[0].mxu0 %v150
    %v509 = vpop.f32.mrb[0].mxu0
    %v510 = vadd.f32 %v105, %v509
    %v511 = vpop.f32.mrb[0].mxu0
    %v512 = vadd.f32 %v109, %v511
    %v513 = vpop.f32.mrb[0].mxu0
    %v514 = vadd.f32 %v105, %v513
    %v515 = vpop.f32.mrb[0].mxu0
    %v516 = vadd.f32 %v109, %v515
    %517 = vmatprep.mubr.bf16.mxu0 0
    %518 = vmatmul.mubr.bf16.gmra.mrb[0].mxu0 %v151
    %v519 = vpop.f32.mrb[0].mxu0
    %v520 = vadd.f32 %v105, %v519
    %v521 = vpop.f32.mrb[0].mxu0
    %v522 = vadd.f32 %v109, %v521
    %v523 = vpop.f32.mrb[0].mxu0
    %v524 = vadd.f32 %v105, %v523
    %v525 = vpop.f32.mrb[0].mxu0
    %v526 = vadd.f32 %v109, %v525
    %527 = vmatprep.mubr.bf16.mxu0 0
    %528 = vmatmul.mubr.bf16.gmra.mrb[0].mxu0 %v152
    %v529 = vpop.f32.mrb[0].mxu0
    %v530 = vadd.f32 %v105, %v529
    %v531 = vpop.f32.mrb[0].mxu0
    %v532 = vadd.f32 %v109, %v531
    %v533 = vpop.f32.mrb[0].mxu0
    %v534 = vadd.f32 %v105, %v533
    %v535 = vpop.f32.mrb[0].mxu0
    %v536 = vadd.f32 %v109, %v535
    %537 = vmatprep.mubr.bf16.mxu0 0
    %538 = vmatmul.mubr.bf16.gmra.mrb[0].mxu0 %v153
    %v539 = vpop.f32.mrb[0].mxu0
    %v540 = vadd.f32 %v105, %v539
    %v541 = vpop.f32.mrb[0].mxu0
    %v542 = vadd.f32 %v109, %v541
    %v543 = vpop.f32.mrb[0].mxu0
    %v544 = vadd.f32 %v105, %v543
    %v545 = vpop.f32.mrb[0].mxu0
    %v546 = vadd.f32 %v109, %v545
    %547 = vdwg.mxu0
    %v548 = vpack.c.bf16 %v361, %v357
    %v549 = vpack.c.bf16 %v363, %v359
    %v550 = vpack.c.bf16 %v474, %v470
    %v551 = vpack.c.bf16 %v476, %v472
    %v552 = vpack.c.bf16 %v371, %v367
    %v553 = vpack.c.bf16 %v373, %v369
    %v554 = vpack.c.bf16 %v484, %v480
    %v555 = vpack.c.bf16 %v486, %v482
    %v556 = vpack.c.bf16 %v381, %v377
    %v557 = vpack.c.bf16 %v383, %v379
    %v558 = vpack.c.bf16 %v494, %v490
    %v559 = vpack.c.bf16 %v496, %v492
    %v560 = vpack.c.bf16 %v391, %v387
    %v561 = vpack.c.bf16 %v393, %v389
    %v562 = vpack.c.bf16 %v504, %v500
    %v563 = vpack.c.bf16 %v506, %v502
    %v564 = vpack.c.bf16 %v401, %v397
    %v565 = vpack.c.bf16 %v403, %v399
    %v566 = vpack.c.bf16 %v514, %v510
    %v567 = vpack.c.bf16 %v516, %v512
    %v568 = vpack.c.bf16 %v411, %v407
    %v569 = vpack.c.bf16 %v413, %v409
    %v570 = vpack.c.bf16 %v524, %v520
    %v571 = vpack.c.bf16 %v526, %v522
    %v572 = vpack.c.bf16 %v421, %v417
    %v573 = vpack.c.bf16 %v423, %v419
    %v574 = vpack.c.bf16 %v534, %v530
    %v575 = vpack.c.bf16 %v536, %v532
    %v576 = vpack.c.bf16 %v431, %v427
    %v577 = vpack.c.bf16 %v433, %v429
    %v578 = vpack.c.bf16 %v544, %v540
    %v579 = vpack.c.bf16 %v546, %v542
    %v612 = vunpack.c.l.b16 %v548
    %v613 = vunpack.c.l.b16 %v549
    %v614 = vunpack.c.l.b16 %v550
    %v615 = vunpack.c.l.b16 %v551
    %v616 = vunpack.c.h.b16 %v548
    %v617 = vunpack.c.h.b16 %v549
    %v618 = vunpack.c.h.b16 %v550
    %v619 = vunpack.c.h.b16 %v551
    %v620 = vunpack.c.l.b16 %v552
    %v621 = vunpack.c.l.b16 %v553
    %v622 = vunpack.c.l.b16 %v554
    %v623 = vunpack.c.l.b16 %v555
    %v624 = vunpack.c.h.b16 %v552
    %v625 = vunpack.c.h.b16 %v553
    %v626 = vunpack.c.h.b16 %v554
    %v627 = vunpack.c.h.b16 %v555
    %v628 = vunpack.c.l.b16 %v556
    %v629 = vunpack.c.l.b16 %v557
    %v630 = vunpack.c.l.b16 %v558
    %v631 = vunpack.c.l.b16 %v559
    %v632 = vunpack.c.h.b16 %v556
    %v633 = vunpack.c.h.b16 %v557
    %v634 = vunpack.c.h.b16 %v558
    %v635 = vunpack.c.h.b16 %v559
    %v636 = vunpack.c.l.b16 %v560
    %v637 = vunpack.c.l.b16 %v561
    %v638 = vunpack.c.l.b16 %v562
    %v639 = vunpack.c.l.b16 %v563
    %v640 = vunpack.c.h.b16 %v560
    %v641 = vunpack.c.h.b16 %v561
    %v642 = vunpack.c.h.b16 %v562
    %v643 = vunpack.c.h.b16 %v563
    %v644 = vunpack.c.l.b16 %v564
    %v645 = vunpack.c.l.b16 %v565
    %v646 = vunpack.c.l.b16 %v566
    %v647 = vunpack.c.l.b16 %v567
    %v648 = vunpack.c.h.b16 %v564
    %v649 = vunpack.c.h.b16 %v565
    %v650 = vunpack.c.h.b16 %v566
    %v651 = vunpack.c.h.b16 %v567
    %v652 = vunpack.c.l.b16 %v568
    %v653 = vunpack.c.l.b16 %v569
    %v654 = vunpack.c.l.b16 %v570
    %v655 = vunpack.c.l.b16 %v571
    %v656 = vunpack.c.h.b16 %v568
    %v657 = vunpack.c.h.b16 %v569
    %v658 = vunpack.c.h.b16 %v570
    %v659 = vunpack.c.h.b16 %v571
    %v660 = vunpack.c.l.b16 %v572
    %v661 = vunpack.c.l.b16 %v573
    %v662 = vunpack.c.l.b16 %v574
    %v663 = vunpack.c.l.b16 %v575
    %v664 = vunpack.c.h.b16 %v572
    %v665 = vunpack.c.h.b16 %v573
    %v666 = vunpack.c.h.b16 %v574
    %v667 = vunpack.c.h.b16 %v575
    %v668 = vunpack.c.l.b16 %v576
    %v669 = vunpack.c.l.b16 %v577
    %v670 = vunpack.c.l.b16 %v578
    %v671 = vunpack.c.l.b16 %v579
    %v672 = vunpack.c.h.b16 %v576
    %v673 = vunpack.c.h.b16 %v577
    %v674 = vunpack.c.h.b16 %v578
    %v675 = vunpack.c.h.b16 %v579
    %v676 = vpack.c.b16 %v613, %v612
    %v677 = vpack.c.b16 %v615, %v614
    %v678 = vpack.c.b16 %v617, %v616
    %v679 = vpack.c.b16 %v619, %v618
    %v680 = vpack.c.b16 %v621, %v620
    %v681 = vpack.c.b16 %v623, %v622
    %v682 = vpack.c.b16 %v625, %v624
    %v683 = vpack.c.b16 %v627, %v626
    %v684 = vpack.c.b16 %v629, %v628
    %v685 = vpack.c.b16 %v631, %v630
    %v686 = vpack.c.b16 %v633, %v632
    %v687 = vpack.c.b16 %v635, %v634
    %v688 = vpack.c.b16 %v637, %v636
    %v689 = vpack.c.b16 %v639, %v638
    %v690 = vpack.c.b16 %v641, %v640
    %v691 = vpack.c.b16 %v643, %v642
    %v692 = vpack.c.b16 %v645, %v644
    %v693 = vpack.c.b16 %v647, %v646
    %v694 = vpack.c.b16 %v649, %v648
    %v695 = vpack.c.b16 %v651, %v650
    %v696 = vpack.c.b16 %v653, %v652
    %v697 = vpack.c.b16 %v655, %v654
    %v698 = vpack.c.b16 %v657, %v656
    %v699 = vpack.c.b16 %v659, %v658
    %v700 = vpack.c.b16 %v661, %v660
    %v701 = vpack.c.b16 %v663, %v662
    %v702 = vpack.c.b16 %v665, %v664
    %v703 = vpack.c.b16 %v667, %v666
    %v704 = vpack.c.b16 %v669, %v668
    %v705 = vpack.c.b16 %v671, %v670
    %v706 = vpack.c.b16 %v673, %v672
    %v707 = vpack.c.b16 %v675, %v674
    %740 = vst [vmem:[#allocation7] sm:$0xff] %v676
    %741 = vst [vmem:[#allocation7 + $0x8] sm:$0xff] %v677
    %742 = vst [vmem:[#allocation7 + $0x10] sm:$0xff] %v678
    %743 = vst [vmem:[#allocation7 + $0x18] sm:$0xff] %v679
    %744 = vst [vmem:[#allocation7 + $0x20] sm:$0xff] %v680
    %745 = vst [vmem:[#allocation7 + $0x28] sm:$0xff] %v681
    %746 = vst [vmem:[#allocation7 + $0x30] sm:$0xff] %v682
    %747 = vst [vmem:[#allocation7 + $0x38] sm:$0xff] %v683
    %748 = vst [vmem:[#allocation7 + $0x40] sm:$0xff] %v684
    %749 = vst [vmem:[#allocation7 + $0x48] sm:$0xff] %v685
    %750 = vst [vmem:[#allocation7 + $0x50] sm:$0xff] %v686
    %751 = vst [vmem:[#allocation7 + $0x58] sm:$0xff] %v687
    %752 = vst [vmem:[#allocation7 + $0x60] sm:$0xff] %v688
    %753 = vst [vmem:[#allocation7 + $0x68] sm:$0xff] %v689
    %754 = vst [vmem:[#allocation7 + $0x70] sm:$0xff] %v690
    %755 = vst [vmem:[#allocation7 + $0x78] sm:$0xff] %v691
    %756 = vst [vmem:[#allocation7 + $0x80] sm:$0xff] %v692
    %757 = vst [vmem:[#allocation7 + $0x88] sm:$0xff] %v693
    %758 = vst [vmem:[#allocation7 + $0x90] sm:$0xff] %v694
    %759 = vst [vmem:[#allocation7 + $0x98] sm:$0xff] %v695
    %760 = vst [vmem:[#allocation7 + $0xa0] sm:$0xff] %v696
    %761 = vst [vmem:[#allocation7 + $0xa8] sm:$0xff] %v697
    %762 = vst [vmem:[#allocation7 + $0xb0] sm:$0xff] %v698
    %763 = vst [vmem:[#allocation7 + $0xb8] sm:$0xff] %v699
    %764 = vst [vmem:[#allocation7 + $0xc0] sm:$0xff] %v700
    %765 = vst [vmem:[#allocation7 + $0xc8] sm:$0xff] %v701
    %766 = vst [vmem:[#allocation7 + $0xd0] sm:$0xff] %v702
    %767 = vst [vmem:[#allocation7 + $0xd8] sm:$0xff] %v703
    %768 = vst [vmem:[#allocation7 + $0xe0] sm:$0xff] %v704
    %769 = vst [vmem:[#allocation7 + $0xe8] sm:$0xff] %v705
    %770 = vst [vmem:[#allocation7 + $0xf0] sm:$0xff] %v706
    %771 = vst [vmem:[#allocation7 + $0xf8] sm:$0xff] %v707
    // Predicated region
    $region22: #{tpu_custom_call.1} parent=1 // pred_check
      _
    $region23: #{tpu_custom_call.1} parent=1 // pred_check_branch
      %773 = sbr.rel (0) target = $region25
    $region24: #{tpu_custom_call.1} parent=1 // pred_region
      %s775 = ssub.s32 4096, 4096
      %776 = vsyncadd [#allocation4], %s775
      %s777 = sshll.u32 [#allocation7], 4
      %s778 = int_to_ptr.vmem [resolvable:$true] %s777
      %783 = dma.vmem_to_hbm [thread:$0]  %s778, 4096, %s3, [#allocation4], 256, 256, 16
    $region25: #{tpu_custom_call.1} parent=1 // pred_fallthru
      _
    // Predicated region
    $region26: #{tpu_custom_call.1} parent=1 // pred_check
      _
    $region27: #{tpu_custom_call.1} parent=1 // pred_check_branch
      %785 = sbr.rel (0) target = $region29
    $region28: #{tpu_custom_call.1} parent=1 // pred_region
      %786 = dma.done [#allocation4], 4096
    $region29: #{tpu_custom_call.1} parent=1 // pred_fallthru
      _
    %787 = vsyncpa [#allocation3], 1
    %788 = vsyncpa [#allocation6], 1
    %789 = vsyncpa [#allocation4], 1

</llo_original>
